<compile_context>
chip_gen: v6e
topology: v6e:2x2x1
jax: 0.10.0
libtpu: 0.0.40
codegen_flags: <defaults>
</compile_context>

<pallas_src>
import functools

import jax
import jax.numpy as jnp
from jax.experimental import pallas as pl
from jax.experimental.pallas import tpu as pltpu

FDIM = 10
LEAKY_SLOPE = 0.1          # MLP uses nn.LeakyReLU(0.1) explicitly in the spec
BN_EPS = 1e-5
LANES = 128                # lane width; weight slab / output are padded to this


def _rup8(n):
    return ((n + 7) // 8) * 8


def _leaky(x):
    return jnp.where(x > 0, x, LEAKY_SLOPE * x)


# ----------------------------- weight slab -----------------------------------
def _slab_offsets(fdim):
    """Row offsets of each parameter block inside the packed weight slab."""
    f2, f4 = 2 * fdim, 4 * fdim
    off = {}
    r = 0
    off["w1a"] = r; r += _rup8(f2)   # node_mlp_1.0 weight [2F, 2F]
    off["w1b"] = r; r += _rup8(f2)   # node_mlp_1.2 weight [2F, 2F]
    off["w2a"] = r; r += _rup8(f4)   # node_mlp_2.0 weight [4F, 4F]
    off["w2b"] = r; r += _rup8(f4)   # node_mlp_2.2 weight [4F, F] (lane padded)
    off["b1a"] = r; r += 1
    off["b1b"] = r; r += 1
    off["b2a"] = r; r += 1
    off["b2b"] = r; r += 1
    off["gamma"] = r; r += 1
    off["beta"] = r; r += 1
    off["rows"] = _rup8(r)
    return off


def pack_weights(params, fdim=FDIM):
    """Pack all weights/biases/BN params into one lane-padded f32 slab (done once)."""
    f2, f4 = 2 * fdim, 4 * fdim
    off = _slab_offsets(fdim)
    slab = jnp.zeros((off["rows"], LANES), jnp.float32)
    slab = slab.at[off["w1a"]:off["w1a"] + f2, :f2].set(params["w1a"])
    slab = slab.at[off["w1b"]:off["w1b"] + f2, :f2].set(params["w1b"])
    slab = slab.at[off["w2a"]:off["w2a"] + f4, :f4].set(params["w2a"])
    slab = slab.at[off["w2b"]:off["w2b"] + f4, :fdim].set(params["w2b"])
    slab = slab.at[off["b1a"], :f2].set(params["b1a"][0])
    slab = slab.at[off["b1b"], :f2].set(params["b1b"][0])
    slab = slab.at[off["b2a"], :f4].set(params["b2a"][0])
    slab = slab.at[off["b2b"], :fdim].set(params["b2b"][0])
    slab = slab.at[off["gamma"], :fdim].set(params["gamma"][0])
    slab = slab.at[off["beta"], :fdim].set(params["beta"][0])
    return slab


# ------------------------------- kernel ---------------------------------------
def tmodel_kernel(xs_ref, xt_ref, ea_ref, u_ref, src_ref, tgt_ref, w_ref, out_ref,
                  *, fdim, S, T, E, off):
    f2, f4 = 2 * fdim, 4 * fdim

    xs = xs_ref[...]          # [S, F]
    xt = xt_ref[...]          # [T, F]
    ea = ea_ref[...]          # [E, F]
    u = u_ref[...]            # [B, F] (B == 1, or B == T)
    src = src_ref[...]        # [E, 1] int32
    tgt = tgt_ref[...]        # [1, E] int32

    # Static slices into the single weight slab (compile-time offsets).
    w1a = w_ref[off["w1a"]:off["w1a"] + f2, :f2]
    w1b = w_ref[off["w1b"]:off["w1b"] + f2, :f2]
    w2a = w_ref[off["w2a"]:off["w2a"] + f4, :f4]
    w2b = w_ref[off["w2b"]:off["w2b"] + f4, :]        # [4F, 128] zero-padded cols
    b1a = w_ref[off["b1a"]:off["b1a"] + 1, :f2]
    b1b = w_ref[off["b1b"]:off["b1b"] + 1, :f2]
    b2a = w_ref[off["b2a"]:off["b2a"] + 1, :f4]
    b2b = w_ref[off["b2b"]:off["b2b"] + 1, :]         # [1, 128]
    gamma = w_ref[off["gamma"]:off["gamma"] + 1, :]   # [1, 128]
    beta = w_ref[off["beta"]:off["beta"] + 1, :]      # [1, 128]

    # --- gather x_s[src] as a one-hot matmul: [E,S] @ [S,F] (MXU friendly) ---
    # (kept f32: exact 0/1 values; bf16 data would drift from the f32 reference)
    src_oh = (jax.lax.broadcasted_iota(jnp.int32, (E, S), 1) == src).astype(jnp.float32)
    x_gath = jnp.dot(src_oh, xs, preferred_element_type=jnp.float32)        # [E, F]

    # --- node_mlp_1 on msg = cat([x_s[src], edge_attr], dim=1): one matmul/layer
    msg_in = jnp.concatenate([x_gath, ea], axis=1)                          # [E, 2F]
    h1 = _leaky(jnp.dot(msg_in, w1a, preferred_element_type=jnp.float32) + b1a)
    msg = jnp.dot(h1, w1b, preferred_element_type=jnp.float32) + b1b        # [E, 2F]

    # --- scatter-sum onto targets; one-hot built pre-transposed [T, E] (no .T)
    tgt_oh = (jax.lax.broadcasted_iota(jnp.int32, (T, E), 0) == tgt).astype(jnp.float32)
    agg = jnp.dot(tgt_oh, msg, preferred_element_type=jnp.float32)          # [T, 2F]

    # --- node_mlp_2 on cat([x_t, agg, u.expand(T, -1)], dim=-1)
    h_cat = jnp.concatenate([xt, agg, jnp.broadcast_to(u, (T, fdim))], axis=1)  # [T, 4F]
    h2 = _leaky(jnp.dot(h_cat, w2a, preferred_element_type=jnp.float32) + b2a)
    # w2b / b2b carry the full 128-lane (zero-padded) width so y, BatchNorm and
    # the final store are lane-dense (padded columns stay exactly 0).
    y = jnp.dot(h2, w2b, preferred_element_type=jnp.float32) + b2b          # [T, 128]

    # --- BatchNorm1d(Fdim), training-mode batch stats, biased variance ---
    # TODO(synk): BatchNorm1d running_mean/running_var updates are a training-time
    # side effect of the torch module, not part of the returned tensor; not implemented.
    mean = jnp.mean(y, axis=0, keepdims=True)
    var = jnp.mean((y - mean) ** 2, axis=0, keepdims=True)
    out_ref[...] = (y - mean) * jax.lax.rsqrt(var + BN_EPS) * gamma + beta


# ------------------------------- wrapper ---------------------------------------
def tmodel_forward(x_s, x_t, edge_index, edge_attr, u, w_slab, fdim=FDIM):
    S, T, E = x_s.shape[0], x_t.shape[0], edge_attr.shape[0]
    # src as a lane-broadcastable column [E,1]; tgt as a sublane-broadcastable
    # row [1,E] so both one-hots are built in their matmul-ready orientation.
    src = edge_index[0].astype(jnp.int32).reshape(E, 1)
    tgt = edge_index[1].astype(jnp.int32).reshape(1, E)

    off = _slab_offsets(fdim)
    kernel = functools.partial(tmodel_kernel, fdim=fdim, S=S, T=T, E=E, off=off)
    vmem = pl.BlockSpec(memory_space=pltpu.MemorySpace.VMEM)

    out_padded = pl.pallas_call(
        kernel,
        out_shape=jax.ShapeDtypeStruct((T, LANES), jnp.float32),  # lane-dense store
        in_specs=[vmem] * 7,
        out_specs=vmem,
    )(x_s, x_t, edge_attr, u, src, tgt, w_slab)
    # Slice the padded output back to [T, Fdim] outside the kernel.
    return out_padded[:, :fdim]


# ----------------------------- init / reference --------------------------------
def init_params(key, fdim=FDIM):
    """PyTorch-style uniform(+-1/sqrt(fan_in)) init; Linear weights stored [in, out]."""
    f_msg, f_msg2 = 2 * fdim, 4 * fdim

    def linear(k, d_in, d_out):
        kw, kb = jax.random.split(k)
        bound = 1.0 / (d_in ** 0.5)
        w = jax.random.uniform(kw, (d_in, d_out), jnp.float32, -bound, bound)
        b = jax.random.uniform(kb, (1, d_out), jnp.float32, -bound, bound)
        return w, b

    k1, k2, k3, k4 = jax.random.split(key, 4)
    w1a, b1a = linear(k1, f_msg, f_msg)      # node_mlp_1.0
    w1b, b1b = linear(k2, f_msg, f_msg)      # node_mlp_1.2
    w2a, b2a = linear(k3, f_msg2, f_msg2)    # node_mlp_2.0
    w2b, b2b = linear(k4, f_msg2, fdim)      # node_mlp_2.2
    gamma = jnp.ones((1, fdim), jnp.float32)
    beta = jnp.zeros((1, fdim), jnp.float32)
    return dict(w1a=w1a, b1a=b1a, w1b=w1b, b1b=b1b,
                w2a=w2a, b2a=b2a, w2b=w2b, b2b=b2b,
                gamma=gamma, beta=beta)


def tmodel_reference(x_s, x_t, edge_index, edge_attr, u, params, fdim=FDIM):
    """Pure-JAX reference mirroring the PyTorch forward (for verification)."""
    src, tgt = edge_index[0], edge_index[1]
    msg = jnp.concatenate([x_s[src], edge_attr], axis=1)
    h = _leaky(msg @ params["w1a"] + params["b1a"])
    msg = h @ params["w1b"] + params["b1b"]
    agg = jnp.zeros((x_t.shape[0], msg.shape[1]), jnp.float32).at[tgt].add(msg)
    u_exp = jnp.broadcast_to(u, (x_t.shape[0], fdim))
    h_cat = jnp.concatenate([x_t, agg, u_exp], axis=-1)
    h2 = _leaky(h_cat @ params["w2a"] + params["b2a"])
    y = h2 @ params["w2b"] + params["b2b"]
    mean = y.mean(0, keepdims=True)
    var = ((y - mean) ** 2).mean(0, keepdims=True)
    return (y - mean) / jnp.sqrt(var + BN_EPS) * params["gamma"] + params["beta"]


if __name__ == "__main__":
    key = jax.random.PRNGKey(0)
    k_p, k_xs, k_xt, k_ea, k_u, k_src, k_tgt = jax.random.split(key, 7)

    S, T, E, B = 6, 5, 8, 1
    x_s = jax.random.normal(k_xs, (S, FDIM), jnp.float32)
    x_t = jax.random.normal(k_xt, (T, FDIM), jnp.float32)
    edge_attr = jax.random.normal(k_ea, (E, FDIM), jnp.float32)
    u = jax.random.normal(k_u, (B, FDIM), jnp.float32)
    src = jax.random.randint(k_src, (E,), 0, S, jnp.int32)
    tgt = jax.random.randint(k_tgt, (E,), 0, T, jnp.int32)
    edge_index = jnp.stack([src, tgt], axis=0)

    params = init_params(k_p)
    w_slab = pack_weights(params)            # packed once, reused every call

    out = tmodel_forward(x_s, x_t, edge_index, edge_attr, u, w_slab)
    out = jax.block_until_ready(out)

    ref = tmodel_reference(x_s, x_t, edge_index, edge_attr, u, params)
    assert out.shape == (T, FDIM)
    assert jnp.allclose(out, ref, atol=1e-4, rtol=1e-4), (out, ref)

    print("KERNEL_OK")
</pallas_src>

<mosaic_0001>
module attributes {stable_mosaic.version = 11 : i64} {
  func.func @tmodel_kernel(%arg0: memref<6x10xf32, #tpu.memory_space<vmem>>, %arg1: memref<5x10xf32, #tpu.memory_space<vmem>>, %arg2: memref<8x10xf32, #tpu.memory_space<vmem>>, %arg3: memref<1x10xf32, #tpu.memory_space<vmem>>, %arg4: memref<8x1xi32, #tpu.memory_space<vmem>>, %arg5: memref<1x8xi32, #tpu.memory_space<vmem>>, %arg6: memref<136x128xf32, #tpu.memory_space<vmem>>, %arg7: memref<5x128xf32, #tpu.memory_space<vmem>>) attributes {dimension_semantics = [], scalar_prefetch = 0 : i64, scratch_operands = 0 : i64, tpu.core_type = #tpu.core_type<tc>} {
    %c0 = arith.constant 0 : index
    %c0_0 = arith.constant 0 : index
    %0 = vector.load %arg0[%c0, %c0_0] : memref<6x10xf32, #tpu.memory_space<vmem>>, vector<6x10xf32>
    %c0_1 = arith.constant 0 : index
    %c0_2 = arith.constant 0 : index
    %1 = vector.load %arg1[%c0_1, %c0_2] : memref<5x10xf32, #tpu.memory_space<vmem>>, vector<5x10xf32>
    %c0_3 = arith.constant 0 : index
    %c0_4 = arith.constant 0 : index
    %2 = vector.load %arg2[%c0_3, %c0_4] : memref<8x10xf32, #tpu.memory_space<vmem>>, vector<8x10xf32>
    %c0_5 = arith.constant 0 : index
    %c0_6 = arith.constant 0 : index
    %3 = vector.load %arg3[%c0_5, %c0_6] : memref<1x10xf32, #tpu.memory_space<vmem>>, vector<1x10xf32>
    %c0_7 = arith.constant 0 : index
    %c0_8 = arith.constant 0 : index
    %4 = vector.load %arg4[%c0_7, %c0_8] : memref<8x1xi32, #tpu.memory_space<vmem>>, vector<8x1xi32>
    %c0_9 = arith.constant 0 : index
    %c0_10 = arith.constant 0 : index
    %5 = vector.load %arg5[%c0_9, %c0_10] : memref<1x8xi32, #tpu.memory_space<vmem>>, vector<1x8xi32>
    %c0_11 = arith.constant 0 : index
    %c0_12 = arith.constant 0 : index
    %6 = vector.load %arg6[%c0_11, %c0_12] : memref<136x128xf32, #tpu.memory_space<vmem>>, vector<20x20xf32>
    %c24 = arith.constant 24 : index
    %c0_13 = arith.constant 0 : index
    %7 = vector.load %arg6[%c24, %c0_13] : memref<136x128xf32, #tpu.memory_space<vmem>>, vector<20x20xf32>
    %c48 = arith.constant 48 : index
    %c0_14 = arith.constant 0 : index
    %8 = vector.load %arg6[%c48, %c0_14] : memref<136x128xf32, #tpu.memory_space<vmem>>, vector<40x40xf32>
    %c88 = arith.constant 88 : index
    %c0_15 = arith.constant 0 : index
    %9 = vector.load %arg6[%c88, %c0_15] : memref<136x128xf32, #tpu.memory_space<vmem>>, vector<40x128xf32>
    %c128 = arith.constant 128 : index
    %c0_16 = arith.constant 0 : index
    %10 = vector.load %arg6[%c128, %c0_16] : memref<136x128xf32, #tpu.memory_space<vmem>>, vector<1x20xf32>
    %c129 = arith.constant 129 : index
    %c0_17 = arith.constant 0 : index
    %11 = vector.load %arg6[%c129, %c0_17] : memref<136x128xf32, #tpu.memory_space<vmem>>, vector<1x20xf32>
    %c130 = arith.constant 130 : index
    %c0_18 = arith.constant 0 : index
    %12 = vector.load %arg6[%c130, %c0_18] : memref<136x128xf32, #tpu.memory_space<vmem>>, vector<1x40xf32>
    %c131 = arith.constant 131 : index
    %c0_19 = arith.constant 0 : index
    %13 = vector.load %arg6[%c131, %c0_19] : memref<136x128xf32, #tpu.memory_space<vmem>>, vector<1x128xf32>
    %c132 = arith.constant 132 : index
    %c0_20 = arith.constant 0 : index
    %14 = vector.load %arg6[%c132, %c0_20] : memref<136x128xf32, #tpu.memory_space<vmem>>, vector<1x128xf32>
    %c133 = arith.constant 133 : index
    %c0_21 = arith.constant 0 : index
    %15 = vector.load %arg6[%c133, %c0_21] : memref<136x128xf32, #tpu.memory_space<vmem>>, vector<1x128xf32>
    %16 = tpu.iota {dimensions = array<i32: 1>} : vector<8x6xi32>
    %17 = vector.broadcast %4 : vector<8x1xi32> to vector<8x6xi32>
    %18 = arith.cmpi eq, %16, %17 : vector<8x6xi32>
    %19 = arith.extui %18 : vector<8x6xi1> to vector<8x6xi32>
    %20 = arith.sitofp %19 : vector<8x6xi32> to vector<8x6xf32>
    %cst = arith.constant dense<0.000000e+00> : vector<8x10xf32>
    %21 = tpu.matmul %20, %0, %cst {dimension_numbers = #tpu.dot_dimension_numbers<[1], [0], [0], [1], [0, 0, 1, 1], [], []>} : vector<8x6xf32>, vector<6x10xf32>, vector<8x10xf32> -> vector<8x10xf32>
    %22 = tpu.concatenate %21, %2 in 1 : vector<8x10xf32>, vector<8x10xf32> -> vector<8x20xf32>
    %cst_22 = arith.constant dense<0.000000e+00> : vector<8x20xf32>
    %23 = tpu.matmul %22, %6, %cst_22 {dimension_numbers = #tpu.dot_dimension_numbers<[1], [0], [0], [1], [0, 0, 1, 1], [], []>} : vector<8x20xf32>, vector<20x20xf32>, vector<8x20xf32> -> vector<8x20xf32>
    %24 = vector.broadcast %10 : vector<1x20xf32> to vector<8x20xf32>
    %25 = arith.addf %23, %24 : vector<8x20xf32>
    %cst_23 = arith.constant 0.000000e+00 : f32
    %26 = vector.broadcast %cst_23 : f32 to vector<8x20xf32>
    %27 = arith.cmpf ogt, %25, %26 : vector<8x20xf32>
    %cst_24 = arith.constant 1.000000e-01 : f32
    %28 = vector.broadcast %cst_24 : f32 to vector<8x20xf32>
    %29 = arith.mulf %28, %25 : vector<8x20xf32>
    %30 = arith.select %27, %25, %29 : vector<8x20xi1>, vector<8x20xf32>
    %cst_25 = arith.constant dense<0.000000e+00> : vector<8x20xf32>
    %31 = tpu.matmul %30, %7, %cst_25 {dimension_numbers = #tpu.dot_dimension_numbers<[1], [0], [0], [1], [0, 0, 1, 1], [], []>} : vector<8x20xf32>, vector<20x20xf32>, vector<8x20xf32> -> vector<8x20xf32>
    %32 = vector.broadcast %11 : vector<1x20xf32> to vector<8x20xf32>
    %33 = arith.addf %31, %32 : vector<8x20xf32>
    %34 = tpu.iota {dimensions = array<i32: 0>} : vector<5x8xi32>
    %35 = vector.broadcast %5 : vector<1x8xi32> to vector<5x8xi32>
    %36 = arith.cmpi eq, %34, %35 : vector<5x8xi32>
    %37 = arith.extui %36 : vector<5x8xi1> to vector<5x8xi32>
    %38 = arith.sitofp %37 : vector<5x8xi32> to vector<5x8xf32>
    %cst_26 = arith.constant dense<0.000000e+00> : vector<5x20xf32>
    %39 = tpu.matmul %38, %33, %cst_26 {dimension_numbers = #tpu.dot_dimension_numbers<[1], [0], [0], [1], [0, 0, 1, 1], [], []>} : vector<5x8xf32>, vector<8x20xf32>, vector<5x20xf32> -> vector<5x20xf32>
    %40 = vector.shape_cast %3 : vector<1x10xf32> to vector<1x10xf32>
    %41 = vector.broadcast %40 : vector<1x10xf32> to vector<5x10xf32>
    %42 = tpu.concatenate %1, %39, %41 in 1 : vector<5x10xf32>, vector<5x20xf32>, vector<5x10xf32> -> vector<5x40xf32>
    %cst_27 = arith.constant dense<0.000000e+00> : vector<5x40xf32>
    %43 = tpu.matmul %42, %8, %cst_27 {dimension_numbers = #tpu.dot_dimension_numbers<[1], [0], [0], [1], [0, 0, 1, 1], [], []>} : vector<5x40xf32>, vector<40x40xf32>, vector<5x40xf32> -> vector<5x40xf32>
    %44 = vector.broadcast %12 : vector<1x40xf32> to vector<5x40xf32>
    %45 = arith.addf %43, %44 : vector<5x40xf32>
    %cst_28 = arith.constant 0.000000e+00 : f32
    %46 = vector.broadcast %cst_28 : f32 to vector<5x40xf32>
    %47 = arith.cmpf ogt, %45, %46 : vector<5x40xf32>
    %cst_29 = arith.constant 1.000000e-01 : f32
    %48 = vector.broadcast %cst_29 : f32 to vector<5x40xf32>
    %49 = arith.mulf %48, %45 : vector<5x40xf32>
    %50 = arith.select %47, %45, %49 : vector<5x40xi1>, vector<5x40xf32>
    %cst_30 = arith.constant dense<0.000000e+00> : vector<5x128xf32>
    %51 = tpu.matmul %50, %9, %cst_30 {dimension_numbers = #tpu.dot_dimension_numbers<[1], [0], [0], [1], [0, 0, 1, 1], [], []>} : vector<5x40xf32>, vector<40x128xf32>, vector<5x128xf32> -> vector<5x128xf32>
    %52 = vector.broadcast %13 : vector<1x128xf32> to vector<5x128xf32>
    %53 = arith.addf %51, %52 : vector<5x128xf32>
    %cst_31 = arith.constant dense<0.000000e+00> : vector<128xf32>
    %54 = vector.multi_reduction <add>, %53, %cst_31 [0] : vector<5x128xf32> to vector<128xf32>
    %55 = vector.shape_cast %54 : vector<128xf32> to vector<1x128xf32>
    %cst_32 = arith.constant 5.000000e+00 : f32
    %56 = vector.broadcast %cst_32 : f32 to vector<1x128xf32>
    %57 = arith.divf %55, %56 : vector<1x128xf32>
    %58 = vector.broadcast %57 : vector<1x128xf32> to vector<5x128xf32>
    %59 = arith.subf %53, %58 : vector<5x128xf32>
    %60 = arith.mulf %59, %59 : vector<5x128xf32>
    %cst_33 = arith.constant dense<0.000000e+00> : vector<128xf32>
    %61 = vector.multi_reduction <add>, %60, %cst_33 [0] : vector<5x128xf32> to vector<128xf32>
    %62 = vector.shape_cast %61 : vector<128xf32> to vector<1x128xf32>
    %cst_34 = arith.constant 5.000000e+00 : f32
    %63 = vector.broadcast %cst_34 : f32 to vector<1x128xf32>
    %64 = arith.divf %62, %63 : vector<1x128xf32>
    %65 = vector.broadcast %57 : vector<1x128xf32> to vector<5x128xf32>
    %66 = arith.subf %53, %65 : vector<5x128xf32>
    %cst_35 = arith.constant 9.99999974E-6 : f32
    %67 = vector.broadcast %cst_35 : f32 to vector<1x128xf32>
    %68 = arith.addf %64, %67 : vector<1x128xf32>
    %69 = math.rsqrt %68 : vector<1x128xf32>
    %70 = vector.broadcast %69 : vector<1x128xf32> to vector<5x128xf32>
    %71 = arith.mulf %66, %70 : vector<5x128xf32>
    %72 = vector.broadcast %14 : vector<1x128xf32> to vector<5x128xf32>
    %73 = arith.mulf %71, %72 : vector<5x128xf32>
    %74 = vector.broadcast %15 : vector<1x128xf32> to vector<5x128xf32>
    %75 = arith.addf %73, %74 : vector<5x128xf32>
    %c0_36 = arith.constant 0 : index
    %c0_37 = arith.constant 0 : index
    %76 = vector.load %arg7[%c0_36, %c0_37] : memref<5x128xf32, #tpu.memory_space<vmem>>, vector<5x128xf32>
    tpu.vector_store %arg7[%c0_36, %c0_37], %75 {strides = array<i32>} : memref<5x128xf32, #tpu.memory_space<vmem>>, vector<5x128xf32>,
    return
  }
}

</mosaic_0001>

<llo_original>
// kernel: tpu_custom_call.1
$region0: #{tpu_custom_call.1}
  #allocation0 [shape = 'u32[]', space=smem, size = 0x4, offset = 0x4, fixed_abs, tag = 'smem constant byte address 0x4 - core index']
  #allocation1 [shape = 'u32[144,128]{1,0:T(1,128)}', space=vmem, size = 0x12000, scoped, tag = 'internal scratch']
  %s0 = inlined_call_operand.vmem [shape: f32[6,10], index: 0, kind: input, shape index: {}]
  %s1 = inlined_call_operand.hbm [shape: f32[5,10], index: 1, kind: input, shape index: {}]
  %s2 = inlined_call_operand.hbm [shape: f32[8,10], index: 2, kind: input, shape index: {}]
  %s3 = inlined_call_operand.vmem [shape: f32[1,10], index: 3, kind: input, shape index: {}]
  %s4 = inlined_call_operand.vmem [shape: s32[8,1], index: 4, kind: input, shape index: {}]
  %s5 = inlined_call_operand.vmem [shape: s32[1,8], index: 5, kind: input, shape index: {}]
  %s6 = inlined_call_operand.hbm [shape: f32[136,128], index: 6, kind: input, shape index: {}]
  %s7 = inlined_call_operand.hbm [shape: f32[5,128], index: 7, kind: output, shape index: {}]
  %s8 = sld [smem:[#allocation0]]
  $region50: #{tpu_custom_call.1} parent=0
    _
  %s10 = ssub.s32 1, %s8
  %s11 = scalar_select 0, %s10, %s8
  $region1: #{tpu_custom_call.1} parent=0
    #allocation2 [shape = 'u8[4096]{0}', space=vmem, size = 0x1000, scoped, tag = 'input window, operand 1, single buffered']
    #allocation3 [shape = 's32[1]{0}', space=sflag, size = 0x4, scoped, tag = 'scoped memory for tpu_custom_call.1']
    #allocation4 [shape = 's32[1]{0}', space=sflag, size = 0x4, scoped, tag = 'scoped memory for tpu_custom_call.1']
    #allocation5 [shape = 'u8[4096]{0}', space=vmem, size = 0x1000, scoped, tag = 'input window, operand 2, single buffered']
    #allocation6 [shape = 's32[1]{0}', space=sflag, size = 0x4, scoped, tag = 'scoped memory for tpu_custom_call.1']
    #allocation7 [shape = 'u8[69632]{0}', space=vmem, size = 0x11000, scoped, tag = 'input window, operand 6, single buffered']
    #allocation8 [shape = 'u8[4096]{0}', space=vmem, size = 0x1000, scoped, tag = 'output window, operand 0, single buffered']
    %12 = vsyncpa [#allocation3], 0
    %13 = vsyncpa [#allocation6], 0
    %14 = vsyncpa [#allocation4], 0
    // Predicated region
    $region2: #{tpu_custom_call.1} parent=1 // pred_check
      _
    $region3: #{tpu_custom_call.1} parent=1 // pred_check_branch
      %16 = sbr.rel (0) target = $region5
    $region4: #{tpu_custom_call.1} parent=1 // pred_region
      _
    $region5: #{tpu_custom_call.1} parent=1 // pred_fallthru
      _
    // Predicated region
    $region6: #{tpu_custom_call.1} parent=1 // pred_check
      _
    $region7: #{tpu_custom_call.1} parent=1 // pred_check_branch
      %18 = sbr.rel (0) target = $region9
    $region8: #{tpu_custom_call.1} parent=1 // pred_region
      %s20 = ssub.s32 128, 128
      %21 = vsyncadd [#allocation3], %s20
      %s23 = sshll.u32 [#allocation2], 4
      %s24 = int_to_ptr.vmem [resolvable:$true] %s23
      %26 = dma.hbm_to_vmem [thread:$0]  %s1, 128, %s24, [#allocation3]
    $region9: #{tpu_custom_call.1} parent=1 // pred_fallthru
      _
    // Predicated region
    $region10: #{tpu_custom_call.1} parent=1 // pred_check
      _
    $region11: #{tpu_custom_call.1} parent=1 // pred_check_branch
      %28 = sbr.rel (0) target = $region13
    $region12: #{tpu_custom_call.1} parent=1 // pred_region
      %s30 = ssub.s32 128, 128
      %31 = vsyncadd [#allocation6], %s30
      %s33 = sshll.u32 [#allocation5], 4
      %s34 = int_to_ptr.vmem [resolvable:$true] %s33
      %36 = dma.hbm_to_vmem [thread:$0]  %s2, 128, %s34, [#allocation6]
    $region13: #{tpu_custom_call.1} parent=1 // pred_fallthru
      _
    // Predicated region
    $region14: #{tpu_custom_call.1} parent=1 // pred_check
      _
    $region15: #{tpu_custom_call.1} parent=1 // pred_check_branch
      %38 = sbr.rel (0) target = $region17
    $region16: #{tpu_custom_call.1} parent=1 // pred_region
      _
    $region17: #{tpu_custom_call.1} parent=1 // pred_fallthru
      _
    // Predicated region
    $region18: #{tpu_custom_call.1} parent=1 // pred_check
      _
    $region19: #{tpu_custom_call.1} parent=1 // pred_check_branch
      %40 = sbr.rel (0) target = $region21
    $region20: #{tpu_custom_call.1} parent=1 // pred_region
      _
    $region21: #{tpu_custom_call.1} parent=1 // pred_fallthru
      _
    // Predicated region
    $region22: #{tpu_custom_call.1} parent=1 // pred_check
      _
    $region23: #{tpu_custom_call.1} parent=1 // pred_check_branch
      %42 = sbr.rel (0) target = $region25
    $region24: #{tpu_custom_call.1} parent=1 // pred_region
      _
    $region25: #{tpu_custom_call.1} parent=1 // pred_fallthru
      _
    // Predicated region
    $region26: #{tpu_custom_call.1} parent=1 // pred_check
      _
    $region27: #{tpu_custom_call.1} parent=1 // pred_check_branch
      %44 = sbr.rel (0) target = $region29
    $region28: #{tpu_custom_call.1} parent=1 // pred_region
      %s46 = ssub.s32 2176, 2176
      %47 = vsyncadd [#allocation6], %s46
      %s48 = sshll.u32 [#allocation7], 4
      %s49 = int_to_ptr.vmem [resolvable:$true] %s48
      %54 = dma.hbm_to_vmem [thread:$0]  %s6, 2176, %s49, [#allocation6], 128, 128, 8
    $region29: #{tpu_custom_call.1} parent=1 // pred_fallthru
      _
    // Predicated region
    $region30: #{tpu_custom_call.1} parent=1 // pred_check
      _
    $region31: #{tpu_custom_call.1} parent=1 // pred_check_branch
      %56 = sbr.rel (0) target = $region33
    $region32: #{tpu_custom_call.1} parent=1 // pred_region
      %57 = dma.done [#allocation3], 128
    $region33: #{tpu_custom_call.1} parent=1 // pred_fallthru
      _
    // Predicated region
    $region34: #{tpu_custom_call.1} parent=1 // pred_check
      _
    $region35: #{tpu_custom_call.1} parent=1 // pred_check_branch
      %59 = sbr.rel (0) target = $region37
    $region36: #{tpu_custom_call.1} parent=1 // pred_region
      %60 = dma.done [#allocation6], 128
    $region37: #{tpu_custom_call.1} parent=1 // pred_fallthru
      _
    // Predicated region
    $region38: #{tpu_custom_call.1} parent=1 // pred_check
      _
    $region39: #{tpu_custom_call.1} parent=1 // pred_check_branch
      %62 = sbr.rel (0) target = $region41
    $region40: #{tpu_custom_call.1} parent=1 // pred_region
      %63 = dma.done [#allocation6], 2176
    $region41: #{tpu_custom_call.1} parent=1 // pred_fallthru
      _
    %v64 = vld [vmem:[%s0] sm:$0x3f]
    %v65 = vld [vmem:[#allocation2] sm:$0x1f]
    %v66 = vld [vmem:[#allocation5] sm:$0xff]
    %v67 = vld [vmem:[%s3] sm:$0x1]
    %v68 = vld [vmem:[%s4] sm:$0xff]
    %v69 = vld [vmem:[%s5] sm:$0x1]
    %v70 = vld [vmem:[#allocation7] sm:$0xff]
    %v71 = vld [vmem:[#allocation7 + $0x8] sm:$0xff]
    %v72 = vld [vmem:[#allocation7 + $0x10] sm:$0xf]
    %v73 = vld [vmem:[#allocation7 + $0x18] sm:$0xff]
    %v74 = vld [vmem:[#allocation7 + $0x20] sm:$0xff]
    %v75 = vld [vmem:[#allocation7 + $0x28] sm:$0xf]
    %v76 = vld [vmem:[#allocation7 + $0x30] sm:$0xff]
    %v77 = vld [vmem:[#allocation7 + $0x38] sm:$0xff]
    %v78 = vld [vmem:[#allocation7 + $0x40] sm:$0xff]
    %v79 = vld [vmem:[#allocation7 + $0x48] sm:$0xff]
    %v80 = vld [vmem:[#allocation7 + $0x50] sm:$0xff]
    %v81 = vld [vmem:[#allocation7 + $0x58] sm:$0xff]
    %v82 = vld [vmem:[#allocation7 + $0x60] sm:$0xff]
    %v83 = vld [vmem:[#allocation7 + $0x68] sm:$0xff]
    %v84 = vld [vmem:[#allocation7 + $0x70] sm:$0xff]
    %v85 = vld [vmem:[#allocation7 + $0x78] sm:$0xff]
    %v86 = vld [vmem:[#allocation7 + $0x80] sm:$0x1]
    %v87 = vld [vmem:[#allocation7 + $0x81] sm:$0x1]
    %v88 = vld [vmem:[#allocation7 + $0x82] sm:$0x1]
    %v89 = vld [vmem:[#allocation7 + $0x83] sm:$0x1]
    %v90 = vld [vmem:[#allocation7 + $0x84] sm:$0x1]
    %v91 = vld [vmem:[#allocation7 + $0x85] sm:$0x1]
    %v92 = vlaneseq
    %v93 = vand.u32 %v92, 127
    %94 = vset.pattern.permute.xlu0 0
    %95 = vperm.xlu0 %94, %v68
    %v96 = vpop.permute.xlu0 %95
    %vm97 = vcmp.eq.s32.totalorder %v93, %v96
    %v98 = vsel %vm97, 1, 0
    %v99 = vcvt.s32.f32 %v98
    %vm100 = vcmask 48128
    %v102 = vsel %vm100, %v99, 0
    %vm104 = vcmask 1045504
    %v106 = vsel %vm104, %v64, 0
    %108 = vmatprep.subr.mxu0 0.0
    %109 = vmatpush1.msra.mxu0 0.0
    %110 = vmatprep.subr.mxu0 0.0
    %111 = vmatpush1.msra.mxu0 0.0
    %112 = vmatprep.subr.mxu0 0.0
    %113 = vmatpush1.msra.mxu0 0.0
    %114 = vmatprep.subr.mxu0 0.0
    %115 = vmatpush1.msra.mxu0 0.0
    %116 = vmatprep.subr.mxu0 0.0
    %117 = vmatpush1.msra.mxu0 0.0
    %118 = vmatprep.subr.mxu0 0.0
    %119 = vmatpush1.msra.mxu0 0.0
    %120 = vmatprep.subr.mxu0 0.0
    %121 = vmatpush1.msra.mxu0 0.0
    %122 = vmatprep.subr.mxu0 0.0
    %123 = vmatpush1.msra.mxu0 0.0
    %124 = vmatprep.subr.mxu0 0.0
    %125 = vmatpush1.msra.mxu0 0.0
    %126 = vmatprep.subr.mxu0 0.0
    %127 = vmatpush1.msra.mxu0 0.0
    %128 = vmatprep.subr.mxu0 0.0
    %129 = vmatpush1.msra.mxu0 0.0
    %130 = vmatprep.subr.mxu0 0.0
    %131 = vmatpush1.msra.mxu0 0.0
    %132 = vmatprep.subr.mxu0 0.0
    %133 = vmatpush1.msra.mxu0 0.0
    %134 = vmatprep.subr.mxu0 0.0
    %135 = vmatpush1.msra.mxu0 0.0
    %136 = vmatprep.subr.mxu0 0.0
    %137 = vmatpush1.msra.mxu0 0.0
    %138 = vmatprep.subr.mxu0 0.0
    %139 = vmatpush1.msra.mxu0 %v106
    %140 = vmatprep.subr.mxu0 0.0
    %141 = vmatpush2.msra.mxu0 0.0
    %142 = vmatprep.subr.mxu0 0.0
    %143 = vmatpush2.msra.mxu0 0.0
    %144 = vmatprep.subr.mxu0 0.0
    %145 = vmatpush2.msra.mxu0 0.0
    %146 = vmatprep.subr.mxu0 0.0
    %147 = vmatpush2.msra.mxu0 0.0
    %148 = vmatprep.subr.mxu0 0.0
    %149 = vmatpush2.msra.mxu0 0.0
    %150 = vmatprep.subr.mxu0 0.0
    %151 = vmatpush2.msra.mxu0 0.0
    %152 = vmatprep.subr.mxu0 0.0
    %153 = vmatpush2.msra.mxu0 0.0
    %154 = vmatprep.subr.mxu0 0.0
    %155 = vmatpush2.msra.mxu0 0.0
    %156 = vmatprep.subr.mxu0 0.0
    %157 = vmatpush2.msra.mxu0 0.0
    %158 = vmatprep.subr.mxu0 0.0
    %159 = vmatpush2.msra.mxu0 0.0
    %160 = vmatprep.subr.mxu0 0.0
    %161 = vmatpush2.msra.mxu0 0.0
    %162 = vmatprep.subr.mxu0 0.0
    %163 = vmatpush2.msra.mxu0 0.0
    %164 = vmatprep.subr.mxu0 0.0
    %165 = vmatpush2.msra.mxu0 0.0
    %166 = vmatprep.subr.mxu0 0.0
    %167 = vmatpush2.msra.mxu0 0.0
    %168 = vmatprep.subr.mxu0 0.0
    %169 = vmatpush2.msra.mxu0 0.0
    %170 = vmatprep.subr.mxu0 0.0
    %171 = vmatpush2.msra.mxu0 0.0
    %172 = vmatprep.mubr.f32.mxu0 0.0
    %173 = vmatmul.mubr.f32.gmra.mxu0 %v102
    %v174 = vpop.f32.mrf.mxu0
    %v175 = vadd.f32 0.0, %v174
    %v176 = vpop.f32.mrf.mxu0
    %177 = vdwg.mxu0
    %179 = vrot.lane.b32.xlu0 %v66, 10
    %v180 = vpop.permute.xlu0 %179
    %vm182 = vcmask 80896
    %v183 = vsel %vm182, %v175, %v180
    %v184 = vlaneseq
    %v185 = vshrl.u32 %v184, 7
    %v186 = vsub.s32 0, %v185
    %v187 = vrot.slane %v86, %v186
    %vm188 = vcmask 162816
    %v190 = vsel %vm188, %v183, 0
    %vm192 = vcmask 1043456
    %v194 = vsel %vm192, %v72, 0
    %196 = vmatprep.subr.mxu0 0.0
    %197 = vmatpush1.msra.mxu0 0.0
    %198 = vmatprep.subr.mxu0 0.0
    %199 = vmatpush1.msra.mxu0 0.0
    %200 = vmatprep.subr.mxu0 0.0
    %201 = vmatpush1.msra.mxu0 0.0
    %202 = vmatprep.subr.mxu0 0.0
    %203 = vmatpush1.msra.mxu0 0.0
    %204 = vmatprep.subr.mxu0 0.0
    %205 = vmatpush1.msra.mxu0 0.0
    %206 = vmatprep.subr.mxu0 0.0
    %207 = vmatpush1.msra.mxu0 0.0
    %208 = vmatprep.subr.mxu0 0.0
    %209 = vmatpush1.msra.mxu0 0.0
    %210 = vmatprep.subr.mxu0 0.0
    %211 = vmatpush1.msra.mxu0 0.0
    %212 = vmatprep.subr.mxu0 0.0
    %213 = vmatpush1.msra.mxu0 0.0
    %214 = vmatprep.subr.mxu0 0.0
    %215 = vmatpush1.msra.mxu0 0.0
    %216 = vmatprep.subr.mxu0 0.0
    %217 = vmatpush1.msra.mxu0 0.0
    %218 = vmatprep.subr.mxu0 0.0
    %219 = vmatpush1.msra.mxu0 0.0
    %220 = vmatprep.subr.mxu0 0.0
    %221 = vmatpush1.msra.mxu0 0.0
    %222 = vmatprep.subr.mxu0 0.0
    %223 = vmatpush1.msra.mxu0 %v194
    %224 = vmatprep.subr.mxu0 0.0
    %225 = vmatpush1.msra.mxu0 %v71
    %226 = vmatprep.subr.mxu0 0.0
    %227 = vmatpush1.msra.mxu0 %v70
    %228 = vmatprep.subr.mxu0 0.0
    %229 = vmatpush2.msra.mxu0 0.0
    %230 = vmatprep.subr.mxu0 0.0
    %231 = vmatpush2.msra.mxu0 0.0
    %232 = vmatprep.subr.mxu0 0.0
    %233 = vmatpush2.msra.mxu0 0.0
    %234 = vmatprep.subr.mxu0 0.0
    %235 = vmatpush2.msra.mxu0 0.0
    %236 = vmatprep.subr.mxu0 0.0
    %237 = vmatpush2.msra.mxu0 0.0
    %238 = vmatprep.subr.mxu0 0.0
    %239 = vmatpush2.msra.mxu0 0.0
    %240 = vmatprep.subr.mxu0 0.0
    %241 = vmatpush2.msra.mxu0 0.0
    %242 = vmatprep.subr.mxu0 0.0
    %243 = vmatpush2.msra.mxu0 0.0
    %244 = vmatprep.subr.mxu0 0.0
    %245 = vmatpush2.msra.mxu0 0.0
    %246 = vmatprep.subr.mxu0 0.0
    %247 = vmatpush2.msra.mxu0 0.0
    %248 = vmatprep.subr.mxu0 0.0
    %249 = vmatpush2.msra.mxu0 0.0
    %250 = vmatprep.subr.mxu0 0.0
    %251 = vmatpush2.msra.mxu0 0.0
    %252 = vmatprep.subr.mxu0 0.0
    %253 = vmatpush2.msra.mxu0 0.0
    %254 = vmatprep.subr.mxu0 0.0
    %255 = vmatpush2.msra.mxu0 0.0
    %256 = vmatprep.subr.mxu0 0.0
    %257 = vmatpush2.msra.mxu0 0.0
    %258 = vmatprep.subr.mxu0 0.0
    %259 = vmatpush2.msra.mxu0 0.0
    %260 = vmatprep.mubr.f32.mxu0 0.0
    %261 = vmatmul.mubr.f32.gmra.mxu0 %v190
    %v262 = vpop.f32.mrf.mxu0
    %v263 = vadd.f32 %v187, %v262
    %v264 = vpop.f32.mrf.mxu0
    %265 = vdwg.mxu0
    %vm266 = vcmp.gt.f32.partialorder %v263, 0.0
    %v267 = vmul.f32 %v263, 0.1
    %v268 = vsel %vm266, %v263, %v267
    %v269 = vlaneseq
    %v270 = vshrl.u32 %v269, 7
    %v271 = vsub.s32 0, %v270
    %v272 = vrot.slane %v87, %v271
    %v274 = vsel %vm188, %v268, 0
    %v277 = vsel %vm192, %v75, 0
    %279 = vmatprep.subr.mxu0 0.0
    %280 = vmatpush1.msra.mxu0 0.0
    %281 = vmatprep.subr.mxu0 0.0
    %282 = vmatpush1.msra.mxu0 0.0
    %283 = vmatprep.subr.mxu0 0.0
    %284 = vmatpush1.msra.mxu0 0.0
    %285 = vmatprep.subr.mxu0 0.0
    %286 = vmatpush1.msra.mxu0 0.0
    %287 = vmatprep.subr.mxu0 0.0
    %288 = vmatpush1.msra.mxu0 0.0
    %289 = vmatprep.subr.mxu0 0.0
    %290 = vmatpush1.msra.mxu0 0.0
    %291 = vmatprep.subr.mxu0 0.0
    %292 = vmatpush1.msra.mxu0 0.0
    %293 = vmatprep.subr.mxu0 0.0
    %294 = vmatpush1.msra.mxu0 0.0
    %295 = vmatprep.subr.mxu0 0.0
    %296 = vmatpush1.msra.mxu0 0.0
    %297 = vmatprep.subr.mxu0 0.0
    %298 = vmatpush1.msra.mxu0 0.0
    %299 = vmatprep.subr.mxu0 0.0
    %300 = vmatpush1.msra.mxu0 0.0
    %301 = vmatprep.subr.mxu0 0.0
    %302 = vmatpush1.msra.mxu0 0.0
    %303 = vmatprep.subr.mxu0 0.0
    %304 = vmatpush1.msra.mxu0 0.0
    %305 = vmatprep.subr.mxu0 0.0
    %306 = vmatpush1.msra.mxu0 %v277
    %307 = vmatprep.subr.mxu0 0.0
    %308 = vmatpush1.msra.mxu0 %v74
    %309 = vmatprep.subr.mxu0 0.0
    %310 = vmatpush1.msra.mxu0 %v73
    %311 = vmatprep.subr.mxu0 0.0
    %312 = vmatpush2.msra.mxu0 0.0
    %313 = vmatprep.subr.mxu0 0.0
    %314 = vmatpush2.msra.mxu0 0.0
    %315 = vmatprep.subr.mxu0 0.0
    %316 = vmatpush2.msra.mxu0 0.0
    %317 = vmatprep.subr.mxu0 0.0
    %318 = vmatpush2.msra.mxu0 0.0
    %319 = vmatprep.subr.mxu0 0.0
    %320 = vmatpush2.msra.mxu0 0.0
    %321 = vmatprep.subr.mxu0 0.0
    %322 = vmatpush2.msra.mxu0 0.0
    %323 = vmatprep.subr.mxu0 0.0
    %324 = vmatpush2.msra.mxu0 0.0
    %325 = vmatprep.subr.mxu0 0.0
    %326 = vmatpush2.msra.mxu0 0.0
    %327 = vmatprep.subr.mxu0 0.0
    %328 = vmatpush2.msra.mxu0 0.0
    %329 = vmatprep.subr.mxu0 0.0
    %330 = vmatpush2.msra.mxu0 0.0
    %331 = vmatprep.subr.mxu0 0.0
    %332 = vmatpush2.msra.mxu0 0.0
    %333 = vmatprep.subr.mxu0 0.0
    %334 = vmatpush2.msra.mxu0 0.0
    %335 = vmatprep.subr.mxu0 0.0
    %336 = vmatpush2.msra.mxu0 0.0
    %337 = vmatprep.subr.mxu0 0.0
    %338 = vmatpush2.msra.mxu0 0.0
    %339 = vmatprep.subr.mxu0 0.0
    %340 = vmatpush2.msra.mxu0 0.0
    %341 = vmatprep.subr.mxu0 0.0
    %342 = vmatpush2.msra.mxu0 0.0
    %343 = vmatprep.mubr.f32.mxu0 0.0
    %344 = vmatmul.mubr.f32.gmra.mxu0 %v274
    %v345 = vpop.f32.mrf.mxu0
    %v346 = vadd.f32 %v272, %v345
    %v347 = vpop.f32.mrf.mxu0
    %348 = vdwg.mxu0
    %v349 = vlaneseq
    %v350 = vshrl.u32 %v349, 7
    %v351 = vlaneseq
    %v352 = vshrl.u32 %v351, 7
    %v353 = vsub.s32 0, %v352
    %v354 = vrot.slane %v69, %v353
    %vm355 = vcmp.eq.s32.totalorder %v350, %v354
    %v356 = vsel %vm355, 1, 0
    %v357 = vcvt.s32.f32 %v356
    %vm358 = vcmask 64512
    %v360 = vsel %vm358, %v357, 0
    %362 = vmatprep.subr.mxu0 0.0
    %363 = vmatpush1.msra.mxu0 0.0
    %364 = vmatprep.subr.mxu0 0.0
    %365 = vmatpush1.msra.mxu0 0.0
    %366 = vmatprep.subr.mxu0 0.0
    %367 = vmatpush1.msra.mxu0 0.0
    %368 = vmatprep.subr.mxu0 0.0
    %369 = vmatpush1.msra.mxu0 0.0
    %370 = vmatprep.subr.mxu0 0.0
    %371 = vmatpush1.msra.mxu0 0.0
    %372 = vmatprep.subr.mxu0 0.0
    %373 = vmatpush1.msra.mxu0 0.0
    %374 = vmatprep.subr.mxu0 0.0
    %375 = vmatpush1.msra.mxu0 0.0
    %376 = vmatprep.subr.mxu0 0.0
    %377 = vmatpush1.msra.mxu0 0.0
    %378 = vmatprep.subr.mxu0 0.0
    %379 = vmatpush1.msra.mxu0 0.0
    %380 = vmatprep.subr.mxu0 0.0
    %381 = vmatpush1.msra.mxu0 0.0
    %382 = vmatprep.subr.mxu0 0.0
    %383 = vmatpush1.msra.mxu0 0.0
    %384 = vmatprep.subr.mxu0 0.0
    %385 = vmatpush1.msra.mxu0 0.0
    %386 = vmatprep.subr.mxu0 0.0
    %387 = vmatpush1.msra.mxu0 0.0
    %388 = vmatprep.subr.mxu0 0.0
    %389 = vmatpush1.msra.mxu0 0.0
    %390 = vmatprep.subr.mxu0 0.0
    %391 = vmatpush1.msra.mxu0 0.0
    %392 = vmatprep.subr.mxu0 0.0
    %393 = vmatpush1.msra.mxu0 %v346
    %394 = vmatprep.subr.mxu0 0.0
    %395 = vmatpush2.msra.mxu0 0.0
    %396 = vmatprep.subr.mxu0 0.0
    %397 = vmatpush2.msra.mxu0 0.0
    %398 = vmatprep.subr.mxu0 0.0
    %399 = vmatpush2.msra.mxu0 0.0
    %400 = vmatprep.subr.mxu0 0.0
    %401 = vmatpush2.msra.mxu0 0.0
    %402 = vmatprep.subr.mxu0 0.0
    %403 = vmatpush2.msra.mxu0 0.0
    %404 = vmatprep.subr.mxu0 0.0
    %405 = vmatpush2.msra.mxu0 0.0
    %406 = vmatprep.subr.mxu0 0.0
    %407 = vmatpush2.msra.mxu0 0.0
    %408 = vmatprep.subr.mxu0 0.0
    %409 = vmatpush2.msra.mxu0 0.0
    %410 = vmatprep.subr.mxu0 0.0
    %411 = vmatpush2.msra.mxu0 0.0
    %412 = vmatprep.subr.mxu0 0.0
    %413 = vmatpush2.msra.mxu0 0.0
    %414 = vmatprep.subr.mxu0 0.0
    %415 = vmatpush2.msra.mxu0 0.0
    %416 = vmatprep.subr.mxu0 0.0
    %417 = vmatpush2.msra.mxu0 0.0
    %418 = vmatprep.subr.mxu0 0.0
    %419 = vmatpush2.msra.mxu0 0.0
    %420 = vmatprep.subr.mxu0 0.0
    %421 = vmatpush2.msra.mxu0 0.0
    %422 = vmatprep.subr.mxu0 0.0
    %423 = vmatpush2.msra.mxu0 0.0
    %424 = vmatprep.subr.mxu0 0.0
    %425 = vmatpush2.msra.mxu0 0.0
    %426 = vmatprep.mubr.f32.mxu0 0.0
    %427 = vmatmul.mubr.f32.gmra.mxu0 %v360
    %v428 = vpop.f32.mrf.mxu0
    %v429 = vadd.f32 0.0, %v428
    %v430 = vpop.f32.mrf.mxu0
    %431 = vdwg.mxu0
    %v433 = vlaneseq
    %v434 = vshrl.u32 %v433, 7
    %v435 = vsub.s32 0, %v434
    %v436 = vrot.slane %v67, %v435
    %438 = vrot.lane.b32.xlu0 %v429, 10
    %v439 = vpop.permute.xlu0 %438
    %441 = vrot.lane.b32.xlu0 %v436, 30
    %v442 = vpop.permute.xlu0 %441
    %v444 = vsel %vm182, %v65, %v439
    %vm445 = vcmask 244736
    %v446 = vsel %vm445, %v444, %v442
    %v447 = vlaneseq
    %v448 = vshrl.u32 %v447, 7
    %v449 = vsub.s32 0, %v448
    %v450 = vrot.slane %v88, %v449
    %vm451 = vcmask 326656
    %v453 = vsel %vm451, %v446, 0
    %455 = vmatprep.subr.mxu0 0.0
    %456 = vmatpush1.msra.mxu0 0.0
    %457 = vmatprep.subr.mxu0 0.0
    %458 = vmatpush1.msra.mxu0 0.0
    %459 = vmatprep.subr.mxu0 0.0
    %460 = vmatpush1.msra.mxu0 0.0
    %461 = vmatprep.subr.mxu0 0.0
    %462 = vmatpush1.msra.mxu0 0.0
    %463 = vmatprep.subr.mxu0 0.0
    %464 = vmatpush1.msra.mxu0 0.0
    %465 = vmatprep.subr.mxu0 0.0
    %466 = vmatpush1.msra.mxu0 0.0
    %467 = vmatprep.subr.mxu0 0.0
    %468 = vmatpush1.msra.mxu0 0.0
    %469 = vmatprep.subr.mxu0 0.0
    %470 = vmatpush1.msra.mxu0 0.0
    %471 = vmatprep.subr.mxu0 0.0
    %472 = vmatpush1.msra.mxu0 0.0
    %473 = vmatprep.subr.mxu0 0.0
    %474 = vmatpush1.msra.mxu0 0.0
    %475 = vmatprep.subr.mxu0 0.0
    %476 = vmatpush1.msra.mxu0 0.0
    %477 = vmatprep.subr.mxu0 0.0
    %478 = vmatpush1.msra.mxu0 %v80
    %479 = vmatprep.subr.mxu0 0.0
    %480 = vmatpush1.msra.mxu0 %v79
    %481 = vmatprep.subr.mxu0 0.0
    %482 = vmatpush1.msra.mxu0 %v78
    %483 = vmatprep.subr.mxu0 0.0
    %484 = vmatpush1.msra.mxu0 %v77
    %485 = vmatprep.subr.mxu0 0.0
    %486 = vmatpush1.msra.mxu0 %v76
    %487 = vmatprep.subr.mxu0 0.0
    %488 = vmatpush2.msra.mxu0 0.0
    %489 = vmatprep.subr.mxu0 0.0
    %490 = vmatpush2.msra.mxu0 0.0
    %491 = vmatprep.subr.mxu0 0.0
    %492 = vmatpush2.msra.mxu0 0.0
    %493 = vmatprep.subr.mxu0 0.0
    %494 = vmatpush2.msra.mxu0 0.0
    %495 = vmatprep.subr.mxu0 0.0
    %496 = vmatpush2.msra.mxu0 0.0
    %497 = vmatprep.subr.mxu0 0.0
    %498 = vmatpush2.msra.mxu0 0.0
    %499 = vmatprep.subr.mxu0 0.0
    %500 = vmatpush2.msra.mxu0 0.0
    %501 = vmatprep.subr.mxu0 0.0
    %502 = vmatpush2.msra.mxu0 0.0
    %503 = vmatprep.subr.mxu0 0.0
    %504 = vmatpush2.msra.mxu0 0.0
    %505 = vmatprep.subr.mxu0 0.0
    %506 = vmatpush2.msra.mxu0 0.0
    %507 = vmatprep.subr.mxu0 0.0
    %508 = vmatpush2.msra.mxu0 0.0
    %509 = vmatprep.subr.mxu0 0.0
    %510 = vmatpush2.msra.mxu0 0.0
    %511 = vmatprep.subr.mxu0 0.0
    %512 = vmatpush2.msra.mxu0 0.0
    %513 = vmatprep.subr.mxu0 0.0
    %514 = vmatpush2.msra.mxu0 0.0
    %515 = vmatprep.subr.mxu0 0.0
    %516 = vmatpush2.msra.mxu0 0.0
    %517 = vmatprep.subr.mxu0 0.0
    %518 = vmatpush2.msra.mxu0 0.0
    %519 = vmatprep.mubr.f32.mxu0 0.0
    %520 = vmatmul.mubr.f32.gmra.mxu0 %v453
    %v521 = vpop.f32.mrf.mxu0
    %v522 = vadd.f32 %v450, %v521
    %v523 = vpop.f32.mrf.mxu0
    %524 = vdwg.mxu0
    %vm525 = vcmp.gt.f32.partialorder %v522, 0.0
    %v526 = vmul.f32 %v522, 0.1
    %v527 = vsel %vm525, %v522, %v526
    %v528 = vlaneseq
    %v529 = vshrl.u32 %v528, 7
    %v530 = vsub.s32 0, %v529
    %v531 = vrot.slane %v89, %v530
    %v533 = vsel %vm451, %v527, 0
    %535 = vmatprep.subr.mxu0 0.0
    %536 = vmatpush1.msra.mxu0 0.0
    %537 = vmatprep.subr.mxu0 0.0
    %538 = vmatpush1.msra.mxu0 0.0
    %539 = vmatprep.subr.mxu0 0.0
    %540 = vmatpush1.msra.mxu0 0.0
    %541 = vmatprep.subr.mxu0 0.0
    %542 = vmatpush1.msra.mxu0 0.0
    %543 = vmatprep.subr.mxu0 0.0
    %544 = vmatpush1.msra.mxu0 0.0
    %545 = vmatprep.subr.mxu0 0.0
    %546 = vmatpush1.msra.mxu0 0.0
    %547 = vmatprep.subr.mxu0 0.0
    %548 = vmatpush1.msra.mxu0 0.0
    %549 = vmatprep.subr.mxu0 0.0
    %550 = vmatpush1.msra.mxu0 0.0
    %551 = vmatprep.subr.mxu0 0.0
    %552 = vmatpush1.msra.mxu0 0.0
    %553 = vmatprep.subr.mxu0 0.0
    %554 = vmatpush1.msra.mxu0 0.0
    %555 = vmatprep.subr.mxu0 0.0
    %556 = vmatpush1.msra.mxu0 0.0
    %557 = vmatprep.subr.mxu0 0.0
    %558 = vmatpush1.msra.mxu0 %v85
    %559 = vmatprep.subr.mxu0 0.0
    %560 = vmatpush1.msra.mxu0 %v84
    %561 = vmatprep.subr.mxu0 0.0
    %562 = vmatpush1.msra.mxu0 %v83
    %563 = vmatprep.subr.mxu0 0.0
    %564 = vmatpush1.msra.mxu0 %v82
    %565 = vmatprep.subr.mxu0 0.0
    %566 = vmatpush1.msra.mxu0 %v81
    %567 = vmatprep.subr.mxu0 0.0
    %568 = vmatpush2.msra.mxu0 0.0
    %569 = vmatprep.subr.mxu0 0.0
    %570 = vmatpush2.msra.mxu0 0.0
    %571 = vmatprep.subr.mxu0 0.0
    %572 = vmatpush2.msra.mxu0 0.0
    %573 = vmatprep.subr.mxu0 0.0
    %574 = vmatpush2.msra.mxu0 0.0
    %575 = vmatprep.subr.mxu0 0.0
    %576 = vmatpush2.msra.mxu0 0.0
    %577 = vmatprep.subr.mxu0 0.0
    %578 = vmatpush2.msra.mxu0 0.0
    %579 = vmatprep.subr.mxu0 0.0
    %580 = vmatpush2.msra.mxu0 0.0
    %581 = vmatprep.subr.mxu0 0.0
    %582 = vmatpush2.msra.mxu0 0.0
    %583 = vmatprep.subr.mxu0 0.0
    %584 = vmatpush2.msra.mxu0 0.0
    %585 = vmatprep.subr.mxu0 0.0
    %586 = vmatpush2.msra.mxu0 0.0
    %587 = vmatprep.subr.mxu0 0.0
    %588 = vmatpush2.msra.mxu0 0.0
    %589 = vmatprep.subr.mxu0 0.0
    %590 = vmatpush2.msra.mxu0 0.0
    %591 = vmatprep.subr.mxu0 0.0
    %592 = vmatpush2.msra.mxu0 0.0
    %593 = vmatprep.subr.mxu0 0.0
    %594 = vmatpush2.msra.mxu0 0.0
    %595 = vmatprep.subr.mxu0 0.0
    %596 = vmatpush2.msra.mxu0 0.0
    %597 = vmatprep.subr.mxu0 0.0
    %598 = vmatpush2.msra.mxu0 0.0
    %599 = vmatprep.mubr.f32.mxu0 0.0
    %600 = vmatmul.mubr.f32.gmra.mxu0 %v533
    %v601 = vpop.f32.mrf.mxu0
    %v602 = vadd.f32 %v531, %v601
    %v603 = vpop.f32.mrf.mxu0
    %604 = vdwg.mxu0
    %vm605 = vcmask 1044480
    %v606 = vsel %vm605, %v602, 0.0
    %v607 = vrot.slane %v606, 4
    %v608 = vadd.f32 %v606, %v607
    %v609 = vrot.slane %v608, 2
    %v610 = vadd.f32 %v608, %v609
    %v611 = vrot.slane %v610, 1
    %v612 = vadd.f32 %v610, %v611
    %v613 = vrcp.pop 5.0
    %v614 = vmul.f32 %v612, %v613
    %v615 = vsub.f32 %v602, %v614
    %v616 = vmul.f32 %v615, %v615
    %v617 = vsel %vm605, %v616, 0.0
    %v618 = vrot.slane %v617, 4
    %v619 = vadd.f32 %v617, %v618
    %v620 = vrot.slane %v619, 2
    %v621 = vadd.f32 %v619, %v620
    %v622 = vrot.slane %v621, 1
    %v623 = vadd.f32 %v621, %v622
    %v624 = vmul.f32 %v623, %v613
    %v625 = vadd.f32 %v624, 1e-05
    %v626 = vrsqrt.pop %v625
    %v627 = vmul.f32 %v615, %v626
    %v628 = vlaneseq
    %v629 = vshrl.u32 %v628, 7
    %v630 = vsub.s32 0, %v629
    %v631 = vrot.slane %v90, %v630
    %v632 = vmul.f32 %v627, %v631
    %v633 = vlaneseq
    %v634 = vshrl.u32 %v633, 7
    %v635 = vsub.s32 0, %v634
    %v636 = vrot.slane %v91, %v635
    %v637 = vadd.f32 %v632, %v636
    %638 = vst [vmem:[#allocation8] sm:$0x1f] %v637
    // Predicated region
    $region42: #{tpu_custom_call.1} parent=1 // pred_check
      _
    $region43: #{tpu_custom_call.1} parent=1 // pred_check_branch
      %640 = sbr.rel (0) target = $region45
    $region44: #{tpu_custom_call.1} parent=1 // pred_region
      %s642 = ssub.s32 128, 128
      %643 = vsyncadd [#allocation4], %s642
      %s645 = sshll.u32 [#allocation8], 4
      %s646 = int_to_ptr.vmem [resolvable:$true] %s645
      %648 = dma.vmem_to_hbm [thread:$0]  %s646, 128, %s7, [#allocation4]
    $region45: #{tpu_custom_call.1} parent=1 // pred_fallthru
      _
    // Predicated region
    $region46: #{tpu_custom_call.1} parent=1 // pred_check
      _
    $region47: #{tpu_custom_call.1} parent=1 // pred_check_branch
      %650 = sbr.rel (0) target = $region49
    $region48: #{tpu_custom_call.1} parent=1 // pred_region
      %651 = dma.done [#allocation4], 128
    $region49: #{tpu_custom_call.1} parent=1 // pred_fallthru
      _
    %652 = vsyncpa [#allocation3], 1
    %653 = vsyncpa [#allocation6], 1
    %654 = vsyncpa [#allocation4], 1

</llo_original>
